<compile_context>
chip_gen: v7x
topology: tpu7x:2x2x1
jax: 0.10.0
libtpu: 0.0.40
codegen_flags: <defaults>
</compile_context>

<pallas_src>
import functools

import jax
import jax.numpy as jnp
from jax import lax
from jax.experimental import pallas as pl
from jax.experimental.pallas import tpu as pltpu


def _make_kernel(n_valid, tile_m, needs_mask):
    """Kernel closure over static instance count / tile size / mask flag."""

    def kernel(x_ref, w1_ref, w2_ref, w3_ref, w4_ref, o_ref, m_ref):
        # x_ref : (1, tile_m, L)      current bag, current instance tile
        # w1_ref: (L, 256)  w2_ref: (256, 128)  w3_ref: (128, 64)  w4_ref: (1, 64)
        # o_ref : (1, 8, 128)         per-bag output block (lane-dense store)
        # m_ref : (1, 1) f32 scratch  running max logit for the current bag
        t = pl.program_id(1)

        x = x_ref[0]                                                    # (tile_m, L)

        h = jnp.maximum(
            jnp.dot(x, w1_ref[...], preferred_element_type=jnp.float32), 0.0)
        h = jnp.maximum(
            jnp.dot(h, w2_ref[...], preferred_element_type=jnp.float32), 0.0)
        h = jnp.maximum(
            jnp.dot(h, w3_ref[...], preferred_element_type=jnp.float32), 0.0)

        # Linear(64 -> 1, bias=False): broadcast-mul + lane reduce (XLU slot),
        # deliberately NOT a 1-wide MXU matmul.
        logits = jnp.sum(h * w4_ref[...], axis=-1, keepdims=True)       # (tile_m, 1)

        if needs_mask:
            # Mask padded instance rows so they never win the max
            # (zero-padded rows would otherwise yield logit 0 -> sigmoid 0.5).
            row = t * tile_m + lax.broadcasted_iota(jnp.int32, (tile_m, 1), 0)
            logits = jnp.where(row < n_valid, logits, -jnp.inf)

        tile_max = jnp.max(logits, axis=0, keepdims=True)               # (1, 1)

        @pl.when(t == 0)
        def _():
            m_ref[...] = jnp.full_like(m_ref, -jnp.inf)

        m_ref[...] = jnp.maximum(m_ref[...], tile_max)

        # sigmoid AFTER the max (monotone increasing, so
        # max(sigmoid(x)) == sigmoid(max(x))): one transcendental per bag.
        @pl.when(t == pl.num_programs(1) - 1)
        def _():
            prob = jax.nn.sigmoid(m_ref[...])                           # (1, 1)
            # Full (8,128) lane-dense store (unmasked vst); wrapper reads [0,0].
            o_ref[0] = jnp.broadcast_to(prob, (8, 128)).astype(o_ref.dtype)

    return kernel


@functools.partial(jax.jit, static_argnames=("tile_m",))
def mi_net_forward_batched(x, w1t, w2t, w3t, w4row, *, tile_m=128):
    """Per-bag mi_Net probabilities.

    x      : (B, N, L) float32
    w1t    : (L, 256), w2t: (256, 128), w3t: (128, 64)  -- pre-transposed (in, out)
    w4row  : (1, 64)                                     -- last layer as a row
    returns: (B,) float32, sigmoid(max_n logits) per bag.
    """
    b, n, length = x.shape
    n_tiles = int(pl.cdiv(n, tile_m))
    n_pad = n_tiles * tile_m
    needs_mask = n_pad != n
    if needs_mask:
        x = jnp.pad(x, ((0, 0), (0, n_pad - n), (0, 0)))

    kernel = _make_kernel(n_valid=n, tile_m=tile_m, needs_mask=needs_mask)

    out = pl.pallas_call(
        kernel,
        out_shape=jax.ShapeDtypeStruct((b, 8, 128), jnp.float32),
        grid=(b, n_tiles),
        in_specs=[
            # instances of bag `bi`, tile `ti`
            pl.BlockSpec((1, tile_m, length), lambda bi, ti: (bi, ti, 0)),
            # weights: constant index_map -> VMEM-resident across all grid steps
            pl.BlockSpec(w1t.shape, lambda bi, ti: (0, 0)),
            pl.BlockSpec(w2t.shape, lambda bi, ti: (0, 0)),
            pl.BlockSpec(w3t.shape, lambda bi, ti: (0, 0)),
            pl.BlockSpec(w4row.shape, lambda bi, ti: (0, 0)),
        ],
        # One (8,128) block per bag, resident across the reduction (tile) axis.
        out_specs=pl.BlockSpec((1, 8, 128), lambda bi, ti: (bi, 0, 0)),
        scratch_shapes=[pltpu.VMEM((1, 1), jnp.float32)],
        compiler_params=pltpu.CompilerParams(
            # bag axis parallel (v7x 2-TC sharding), reduction axis arbitrary/last
            dimension_semantics=("parallel", "arbitrary"),
        ),
    )(x, w1t, w2t, w3t, w4row)

    return out[:, 0, 0]


def prepare_params(w1, w2, w3, w4):
    """Transpose PyTorch (out, in) Linear weights ONCE, outside the forward path."""
    return (jnp.asarray(w1.T),   # (L, 256)
            jnp.asarray(w2.T),   # (256, 128)
            jnp.asarray(w3.T),   # (128, 64)
            jnp.asarray(w4))     # (1, 64) -- already a row


def mi_net_forward(x, params, *, tile_m=128):
    """Matches mi_Net.forward exactly: torch.max(sigmoid(logits)[0], 0)[0] -> shape (1,).

    All bags are processed in one pallas_call (weights stay VMEM-resident);
    bag 0 is selected at the end, which is mathematically identical to the
    PyTorch post-MLP x[0] selection.
    """
    w1t, w2t, w3t, w4row = params
    probs = mi_net_forward_batched(x, w1t, w2t, w3t, w4row, tile_m=tile_m)
    return probs[0:1]


def _reference_forward(x, w1, w2, w3, w4):
    h = jnp.maximum(x @ w1.T, 0.0)
    h = jnp.maximum(h @ w2.T, 0.0)
    h = jnp.maximum(h @ w3.T, 0.0)
    p = jax.nn.sigmoid(h @ w4.T)          # (B, N, 1)
    return jnp.max(p[0], axis=0)          # (1,)


def _reference_all_bags(x, w1, w2, w3, w4):
    h = jnp.maximum(x @ w1.T, 0.0)
    h = jnp.maximum(h @ w2.T, 0.0)
    h = jnp.maximum(h @ w3.T, 0.0)
    p = jax.nn.sigmoid(h @ w4.T)          # (B, N, 1)
    return jnp.max(p, axis=1)[:, 0]       # (B,)


if __name__ == "__main__":
    # Several bags, instance count not a multiple of the tile (exercises masking).
    B, N, LENGTH = 3, 200, 128
    TILE_M = 128   # fills the 128x128 MXU on v5e; also fine on v6e/v7x.

    key = jax.random.PRNGKey(0)
    kx, k1, k2, k3, k4 = jax.random.split(key, 5)

    x = jax.random.normal(kx, (B, N, LENGTH), dtype=jnp.float32)

    def kaiming_uniform(k, out_f, in_f):
        bound = 1.0 / jnp.sqrt(jnp.float32(in_f))
        return jax.random.uniform(k, (out_f, in_f), jnp.float32, -bound, bound)

    # PyTorch Linear weight layout: (out_features, in_features), bias=False.
    w1 = kaiming_uniform(k1, 256, LENGTH)
    w2 = kaiming_uniform(k2, 128, 256)
    w3 = kaiming_uniform(k3, 64, 128)
    w4 = kaiming_uniform(k4, 1, 64)

    params = prepare_params(w1, w2, w3, w4)   # transposed once, not per call

    # Module-equivalent forward (bag 0, shape (1,)).
    out = mi_net_forward(x, params, tile_m=TILE_M)
    out = jax.block_until_ready(out)
    ref = _reference_forward(x, w1, w2, w3, w4)
    assert out.shape == (1,), out.shape
    assert jnp.allclose(out, ref, atol=1e-4, rtol=1e-4), (out, ref)

    # Batched path: per-bag probabilities for the whole DataLoader batch.
    probs = jax.block_until_ready(
        mi_net_forward_batched(x, *params, tile_m=TILE_M))
    ref_all = _reference_all_bags(x, w1, w2, w3, w4)
    assert probs.shape == (B,), probs.shape
    assert jnp.allclose(probs, ref_all, atol=1e-4, rtol=1e-4), (probs, ref_all)

    print("KERNEL_OK")
</pallas_src>

<mosaic_0001>
module attributes {stable_mosaic.version = 11 : i64} {
  func.func @kernel(%arg0: i32, %arg1: i32, %arg2: memref<1x128x128xf32, #tpu.memory_space<vmem>>, %arg3: memref<128x256xf32, #tpu.memory_space<vmem>>, %arg4: memref<256x128xf32, #tpu.memory_space<vmem>>, %arg5: memref<128x64xf32, #tpu.memory_space<vmem>>, %arg6: memref<1x64xf32, #tpu.memory_space<vmem>>, %arg7: memref<1x8x128xf32, #tpu.memory_space<vmem>>, %arg8: memref<1x1xf32, #tpu.memory_space<vmem>>) attributes {dimension_semantics = [#tpu.dimension_semantics<parallel>, #tpu.dimension_semantics<arbitrary>], iteration_bounds = array<i64: 3, 2>, scalar_prefetch = 0 : i64, scratch_operands = 1 : i64, tpu.core_type = #tpu.core_type<tc>, window_params = [{transform_indices = @transform_0, window_bounds = array<i64: 1, 128, 128>}, {pipeline_mode = #tpu.pipeline_mode<synchronous>, transform_indices = @transform_1, window_bounds = array<i64: 128, 256>}, {pipeline_mode = #tpu.pipeline_mode<synchronous>, transform_indices = @transform_2, window_bounds = array<i64: 256, 128>}, {pipeline_mode = #tpu.pipeline_mode<synchronous>, transform_indices = @transform_3, window_bounds = array<i64: 128, 64>}, {pipeline_mode = #tpu.pipeline_mode<synchronous>, transform_indices = @transform_4, window_bounds = array<i64: 1, 64>}, {transform_indices = @transform_5, window_bounds = array<i64: 1, 8, 128>}]} {
    %c0 = arith.constant 0 : index
    %c0_0 = arith.constant 0 : index
    %c0_1 = arith.constant 0 : index
    %0 = vector.load %arg2[%c0, %c0_0, %c0_1] : memref<1x128x128xf32, #tpu.memory_space<vmem>>, vector<1x128x128xf32>
    %1 = vector.shape_cast %0 : vector<1x128x128xf32> to vector<128x128xf32>
    %c0_2 = arith.constant 0 : index
    %c0_3 = arith.constant 0 : index
    %2 = vector.load %arg3[%c0_2, %c0_3] : memref<128x256xf32, #tpu.memory_space<vmem>>, vector<128x256xf32>
    %cst = arith.constant dense<0.000000e+00> : vector<128x256xf32>
    %3 = tpu.matmul %1, %2, %cst {dimension_numbers = #tpu.dot_dimension_numbers<[1], [0], [0], [1], [0, 0, 1, 1], [], []>} : vector<128x128xf32>, vector<128x256xf32>, vector<128x256xf32> -> vector<128x256xf32>
    %cst_4 = arith.constant 0.000000e+00 : f32
    %4 = vector.broadcast %cst_4 : f32 to vector<128x256xf32>
    %5 = arith.maximumf %3, %4 : vector<128x256xf32>
    %c0_5 = arith.constant 0 : index
    %c0_6 = arith.constant 0 : index
    %6 = vector.load %arg4[%c0_5, %c0_6] : memref<256x128xf32, #tpu.memory_space<vmem>>, vector<256x128xf32>
    %cst_7 = arith.constant dense<0.000000e+00> : vector<128x128xf32>
    %7 = tpu.matmul %5, %6, %cst_7 {dimension_numbers = #tpu.dot_dimension_numbers<[1], [0], [0], [1], [0, 0, 1, 1], [], []>} : vector<128x256xf32>, vector<256x128xf32>, vector<128x128xf32> -> vector<128x128xf32>
    %cst_8 = arith.constant 0.000000e+00 : f32
    %8 = vector.broadcast %cst_8 : f32 to vector<128x128xf32>
    %9 = arith.maximumf %7, %8 : vector<128x128xf32>
    %c0_9 = arith.constant 0 : index
    %c0_10 = arith.constant 0 : index
    %10 = vector.load %arg5[%c0_9, %c0_10] : memref<128x64xf32, #tpu.memory_space<vmem>>, vector<128x64xf32>
    %cst_11 = arith.constant dense<0.000000e+00> : vector<128x64xf32>
    %11 = tpu.matmul %9, %10, %cst_11 {dimension_numbers = #tpu.dot_dimension_numbers<[1], [0], [0], [1], [0, 0, 1, 1], [], []>} : vector<128x128xf32>, vector<128x64xf32>, vector<128x64xf32> -> vector<128x64xf32>
    %cst_12 = arith.constant 0.000000e+00 : f32
    %12 = vector.broadcast %cst_12 : f32 to vector<128x64xf32>
    %13 = arith.maximumf %11, %12 : vector<128x64xf32>
    %c0_13 = arith.constant 0 : index
    %c0_14 = arith.constant 0 : index
    %14 = vector.load %arg6[%c0_13, %c0_14] : memref<1x64xf32, #tpu.memory_space<vmem>>, vector<1x64xf32>
    %15 = vector.broadcast %14 : vector<1x64xf32> to vector<128x64xf32>
    %16 = arith.mulf %13, %15 : vector<128x64xf32>
    %cst_15 = arith.constant dense<0.000000e+00> : vector<128xf32>
    %17 = vector.multi_reduction <add>, %16, %cst_15 [1] : vector<128x64xf32> to vector<128xf32>
    %18 = vector.shape_cast %17 : vector<128xf32> to vector<128x1xf32>
    %c128_i32 = arith.constant 128 : i32
    %19 = arith.muli %arg1, %c128_i32 : i32
    %20 = tpu.iota {dimensions = array<i32: 0>} : vector<128x1xi32>
    %21 = vector.broadcast %19 : i32 to vector<128x1xi32>
    %22 = arith.addi %21, %20 : vector<128x1xi32>
    %c200_i32 = arith.constant 200 : i32
    %23 = vector.broadcast %c200_i32 : i32 to vector<128x1xi32>
    %24 = arith.cmpi slt, %22, %23 : vector<128x1xi32>
    %cst_16 = arith.constant 0xFF800000 : f32
    %25 = vector.broadcast %cst_16 : f32 to vector<128x1xf32>
    %26 = arith.select %24, %18, %25 : vector<128x1xi1>, vector<128x1xf32>
    %cst_17 = arith.constant dense<0xFF800000> : vector<1xf32>
    %27 = vector.multi_reduction <maximumf>, %26, %cst_17 [0] : vector<128x1xf32> to vector<1xf32>
    %28 = vector.shape_cast %27 : vector<1xf32> to vector<1x1xf32>
    %c0_i32 = arith.constant 0 : i32
    %29 = arith.cmpi eq, %arg1, %c0_i32 : i32
    %30 = arith.extui %29 : i1 to i32
    %c0_i32_18 = arith.constant 0 : i32
    %31 = arith.cmpi ne, %30, %c0_i32_18 : i32
    scf.if %31 {
      %cst_24 = arith.constant 0xFF800000 : f32
      %38 = vector.broadcast %cst_24 : f32 to vector<1x1xf32>
      %c0_25 = arith.constant 0 : index
      %c0_26 = arith.constant 0 : index
      %39 = vector.load %arg8[%c0_25, %c0_26] : memref<1x1xf32, #tpu.memory_space<vmem>>, vector<1x1xf32>
      tpu.vector_store %arg8[%c0_25, %c0_26], %38 {strides = array<i32>} : memref<1x1xf32, #tpu.memory_space<vmem>>, vector<1x1xf32>,
    } else {
    }
    %c0_19 = arith.constant 0 : index
    %c0_20 = arith.constant 0 : index
    %32 = vector.load %arg8[%c0_19, %c0_20] : memref<1x1xf32, #tpu.memory_space<vmem>>, vector<1x1xf32>
    %33 = arith.maximumf %32, %28 : vector<1x1xf32>
    %c0_21 = arith.constant 0 : index
    %c0_22 = arith.constant 0 : index
    %34 = vector.load %arg8[%c0_21, %c0_22] : memref<1x1xf32, #tpu.memory_space<vmem>>, vector<1x1xf32>
    tpu.vector_store %arg8[%c0_21, %c0_22], %33 {strides = array<i32>} : memref<1x1xf32, #tpu.memory_space<vmem>>, vector<1x1xf32>,
    %c1_i32 = arith.constant 1 : i32
    %35 = arith.cmpi eq, %arg1, %c1_i32 : i32
    %36 = arith.extui %35 : i1 to i32
    %c0_i32_23 = arith.constant 0 : i32
    %37 = arith.cmpi ne, %36, %c0_i32_23 : i32
    scf.if %37 {
      %c0_24 = arith.constant 0 : index
      %c0_25 = arith.constant 0 : index
      %38 = vector.load %arg8[%c0_24, %c0_25] : memref<1x1xf32, #tpu.memory_space<vmem>>, vector<1x1xf32>
      %39 = arith.negf %38 : vector<1x1xf32>
      %40 = math.exp %39 : vector<1x1xf32>
      %cst_26 = arith.constant 1.000000e+00 : f32
      %41 = vector.broadcast %cst_26 : f32 to vector<1x1xf32>
      %42 = arith.addf %41, %40 : vector<1x1xf32>
      %43 = arith.divf %41, %42 : vector<1x1xf32>
      %44 = vector.shape_cast %43 : vector<1x1xf32> to vector<1x1xf32>
      %45 = vector.broadcast %44 : vector<1x1xf32> to vector<8x128xf32>
      %c0_27 = arith.constant 0 : index
      %c0_28 = arith.constant 0 : index
      %c0_29 = arith.constant 0 : index
      %46 = vector.load %arg7[%c0_27, %c0_28, %c0_29] : memref<1x8x128xf32, #tpu.memory_space<vmem>>, vector<1x8x128xf32>
      %47 = vector.shape_cast %46 : vector<1x8x128xf32> to vector<8x128xf32>
      %48 = vector.shape_cast %45 : vector<8x128xf32> to vector<1x8x128xf32>
      tpu.vector_store %arg7[%c0_27, %c0_28, %c0_29], %48 {strides = array<i32>} : memref<1x8x128xf32, #tpu.memory_space<vmem>>, vector<1x8x128xf32>,
    } else {
    }
    return
  }
  func.func @transform_0(%arg0: i32, %arg1: i32) -> (i32, i32, i32) {
    %c0_i32 = arith.constant 0 : i32
    %c0_i32_0 = arith.constant 0 : i32
    return %arg0, %arg1, %c0_i32 : i32, i32, i32
  }
  func.func @transform_1(%arg0: i32, %arg1: i32) -> (i32, i32) {
    %c0_i32 = arith.constant 0 : i32
    %c0_i32_0 = arith.constant 0 : i32
    %c0_i32_1 = arith.constant 0 : i32
    return %c0_i32, %c0_i32_0 : i32, i32
  }
  func.func @transform_2(%arg0: i32, %arg1: i32) -> (i32, i32) {
    %c0_i32 = arith.constant 0 : i32
    %c0_i32_0 = arith.constant 0 : i32
    %c0_i32_1 = arith.constant 0 : i32
    return %c0_i32, %c0_i32_0 : i32, i32
  }
  func.func @transform_3(%arg0: i32, %arg1: i32) -> (i32, i32) {
    %c0_i32 = arith.constant 0 : i32
    %c0_i32_0 = arith.constant 0 : i32
    %c0_i32_1 = arith.constant 0 : i32
    return %c0_i32, %c0_i32_0 : i32, i32
  }
  func.func @transform_4(%arg0: i32, %arg1: i32) -> (i32, i32) {
    %c0_i32 = arith.constant 0 : i32
    %c0_i32_0 = arith.constant 0 : i32
    %c0_i32_1 = arith.constant 0 : i32
    return %c0_i32, %c0_i32_0 : i32, i32
  }
  func.func @transform_5(%arg0: i32, %arg1: i32) -> (i32, i32, i32) {
    %c0_i32 = arith.constant 0 : i32
    %c0_i32_0 = arith.constant 0 : i32
    %c0_i32_1 = arith.constant 0 : i32
    return %arg0, %c0_i32, %c0_i32_0 : i32, i32, i32
  }
}

</mosaic_0001>

<llo_original>
// kernel: mi_net_forward_batched.1
$region0: #{mi_net_forward_batched.1}
  #allocation0 [shape = 'u32[]', space=smem, size = 0x4, offset = 0x4, fixed_abs, tag = 'smem constant byte address 0x4 - core index']
  #allocation1 [shape = 'u32[144,128]{1,0:T(1,128)}', space=vmem, size = 0x12000, scoped, tag = 'internal scratch']
  #allocation2 [shape = 'f32[1,1]{1,0:T(1,128)}', space=vmem, size = 0x200, scoped, tag = 'scratch operand']
  %s0 = inlined_call_operand.vmem [shape: f32[3,256,128], index: 0, kind: input, shape index: {}]
  %s1 = inlined_call_operand.vmem [shape: f32[128,256], index: 1, kind: input, shape index: {}]
  %s2 = inlined_call_operand.vmem [shape: f32[256,128], index: 2, kind: input, shape index: {}]
  %s3 = inlined_call_operand.vmem [shape: f32[128,64], index: 3, kind: input, shape index: {}]
  %s4 = inlined_call_operand.vmem [shape: f32[1,64], index: 4, kind: input, shape index: {}]
  %s5 = inlined_call_operand.vmem [shape: f32[3,8,128], index: 5, kind: output, shape index: {}]
  %s6 = sld [smem:[#allocation0]]
  $region61: #{mi_net_forward_batched.1} parent=0
    _
  %s8 = ssub.s32 1, %s6
  %s9 = scalar_select 0, %s8, %s6
  loop: start=0, step=1, limit=8
  $region2: #{mi_net_forward_batched.1} parent=0 // loop_pre_header
    _
  $region3: #{mi_net_forward_batched.1} parent=0 // loop_header
    %s11 = sphi 0, %s15
    %p12 = scmp.ge.s32.totalorder %s11, 8
    %s18 = sphi 0, %s30
    %s19 = sphi 0, %s26
    %s20 = sphi 0, %s18
    %s21 = sphi 0, %s19
    %s22 = sphi 0, %s20
    %s23 = sphi 0, %s21
    %s35 = sphi 0, %s37
    %s38 = sphi 0, %s35
    %s39 = sphi 0, %s38
    %s55 = sphi 0, %s39
    %s59 = sphi 0, %s59
    %s61 = sphi 0, %s59
    %s62 = sphi 0, %s61
    %s76 = sphi 0, %s62
    %s80 = sphi 0, %s80
    %s82 = sphi 0, %s80
    %s83 = sphi 0, %s82
    %s97 = sphi 0, %s83
    %s101 = sphi 0, %s101
    %s103 = sphi 0, %s101
    %s104 = sphi 0, %s103
    %s118 = sphi 0, %s104
    %s122 = sphi 0, %s122
    %s124 = sphi 0, %s122
    %s125 = sphi 0, %s124
    %s139 = sphi 0, %s125
    %s145 = sphi 0, %s147
    %s148 = sphi 0, %s145
    %s149 = sphi 0, %s148
    %s165 = sphi 0, %s149
  $region4: #{mi_net_forward_batched.1} parent=0 // loop_header_branch
    %14 = sbr.rel (%p12) target = $region8
  $region5: #{mi_net_forward_batched.1} parent=0 // loop_body
    %s16 = ssub.s32 %s11, 1
    %s17 = ssub.s32 %s11, 2
    %s24 = sadd.s32 1, %s19
    %p25 = scmp.ge.s32.totalorder %s24, 2
    %s26 = scalar_select %p25, 0, %s24
    %s27 = sadd.s32 1, %s18
    %s28 = scalar_select %p25, %s27, %s18
    %p29 = scmp.ge.s32.totalorder %s28, 3
    %s30 = scalar_select %p29, 0, %s28
    %s31 = ssub.s32 %s18, %s30
    %s32 = ssub.s32 %s19, %s26
    %s33 = sor.u32 %s31, %s32
    %p34 = scmp.eq.s32.totalorder %s33, 0
    %s36 = sadd.s32 %s35, 1
    %s37 = scalar_select %p34, %s35, %s36
    %p40 = pneg %p34
    %p41 = scmp.eq.s32.totalorder %s11, 5
    %p42 = por %p40, %p41
    %p43 = scmp.ne.s32.totalorder %s35, %s38
    %p44 = scmp.eq.s32.totalorder %s11, 0
    %p45 = por %p43, %p44
    %p46 = scmp.ne.s32.totalorder %s35, %s38
    %p47 = scmp.eq.s32.totalorder %s16, 5
    %p48 = por %p46, %p47
    %p49 = scmp.ne.s32.totalorder %s38, %s39
    %p50 = scmp.eq.s32.totalorder %s16, 0
    %p51 = por %p49, %p50
    %p52 = scmp.ne.s32.totalorder %s38, %s39
    %p53 = scmp.eq.s32.totalorder %s17, 5
    %p54 = por %p52, %p53
    %p56 = scmp.ne.s32.totalorder %s39, %s55
    %p57 = scmp.eq.s32.totalorder %s17, 0
    %p58 = por %p56, %p57
    %s60 = sadd.s32 %s59, 1
    %p63 = scmp.eq.s32.totalorder %s11, 5
    %p64 = scmp.ne.s32.totalorder %s59, %s61
    %p65 = scmp.eq.s32.totalorder %s11, 0
    %p66 = por %p64, %p65
    %p67 = scmp.ne.s32.totalorder %s59, %s61
    %p68 = scmp.eq.s32.totalorder %s16, 5
    %p69 = por %p67, %p68
    %p70 = scmp.ne.s32.totalorder %s61, %s62
    %p71 = scmp.eq.s32.totalorder %s16, 0
    %p72 = por %p70, %p71
    %p73 = scmp.ne.s32.totalorder %s61, %s62
    %p74 = scmp.eq.s32.totalorder %s17, 5
    %p75 = por %p73, %p74
    %p77 = scmp.ne.s32.totalorder %s62, %s76
    %p78 = scmp.eq.s32.totalorder %s17, 0
    %p79 = por %p77, %p78
    %s81 = sadd.s32 %s80, 1
    %p84 = scmp.eq.s32.totalorder %s11, 5
    %p85 = scmp.ne.s32.totalorder %s80, %s82
    %p86 = scmp.eq.s32.totalorder %s11, 0
    %p87 = por %p85, %p86
    %p88 = scmp.ne.s32.totalorder %s80, %s82
    %p89 = scmp.eq.s32.totalorder %s16, 5
    %p90 = por %p88, %p89
    %p91 = scmp.ne.s32.totalorder %s82, %s83
    %p92 = scmp.eq.s32.totalorder %s16, 0
    %p93 = por %p91, %p92
    %p94 = scmp.ne.s32.totalorder %s82, %s83
    %p95 = scmp.eq.s32.totalorder %s17, 5
    %p96 = por %p94, %p95
    %p98 = scmp.ne.s32.totalorder %s83, %s97
    %p99 = scmp.eq.s32.totalorder %s17, 0
    %p100 = por %p98, %p99
    %s102 = sadd.s32 %s101, 1
    %p105 = scmp.eq.s32.totalorder %s11, 5
    %p106 = scmp.ne.s32.totalorder %s101, %s103
    %p107 = scmp.eq.s32.totalorder %s11, 0
    %p108 = por %p106, %p107
    %p109 = scmp.ne.s32.totalorder %s101, %s103
    %p110 = scmp.eq.s32.totalorder %s16, 5
    %p111 = por %p109, %p110
    %p112 = scmp.ne.s32.totalorder %s103, %s104
    %p113 = scmp.eq.s32.totalorder %s16, 0
    %p114 = por %p112, %p113
    %p115 = scmp.ne.s32.totalorder %s103, %s104
    %p116 = scmp.eq.s32.totalorder %s17, 5
    %p117 = por %p115, %p116
    %p119 = scmp.ne.s32.totalorder %s104, %s118
    %p120 = scmp.eq.s32.totalorder %s17, 0
    %p121 = por %p119, %p120
    %s123 = sadd.s32 %s122, 1
    %p126 = scmp.eq.s32.totalorder %s11, 5
    %p127 = scmp.ne.s32.totalorder %s122, %s124
    %p128 = scmp.eq.s32.totalorder %s11, 0
    %p129 = por %p127, %p128
    %p130 = scmp.ne.s32.totalorder %s122, %s124
    %p131 = scmp.eq.s32.totalorder %s16, 5
    %p132 = por %p130, %p131
    %p133 = scmp.ne.s32.totalorder %s124, %s125
    %p134 = scmp.eq.s32.totalorder %s16, 0
    %p135 = por %p133, %p134
    %p136 = scmp.ne.s32.totalorder %s124, %s125
    %p137 = scmp.eq.s32.totalorder %s17, 5
    %p138 = por %p136, %p137
    %p140 = scmp.ne.s32.totalorder %s125, %s139
    %p141 = scmp.eq.s32.totalorder %s17, 0
    %p142 = por %p140, %p141
    %s143 = ssub.s32 %s18, %s30
    %p144 = scmp.eq.s32.totalorder %s143, 0
    %s146 = sadd.s32 %s145, 1
    %s147 = scalar_select %p144, %s145, %s146
    %p150 = pneg %p144
    %p151 = scmp.eq.s32.totalorder %s11, 5
    %p152 = por %p150, %p151
    %p153 = scmp.ne.s32.totalorder %s145, %s148
    %p154 = scmp.eq.s32.totalorder %s11, 0
    %p155 = por %p153, %p154
    %p156 = scmp.ne.s32.totalorder %s145, %s148
    %p157 = scmp.eq.s32.totalorder %s16, 5
    %p158 = por %p156, %p157
    %p159 = scmp.ne.s32.totalorder %s148, %s149
    %p160 = scmp.eq.s32.totalorder %s16, 0
    %p161 = por %p159, %p160
    %p162 = scmp.ne.s32.totalorder %s148, %s149
    %p163 = scmp.eq.s32.totalorder %s17, 5
    %p164 = por %p162, %p163
    %p166 = scmp.ne.s32.totalorder %s149, %s165
    %p167 = scmp.eq.s32.totalorder %s17, 0
    %p168 = por %p166, %p167
    %p169 = scmp.le.s32.totalorder 1, %s11
    %p170 = scmp.lt.s32.totalorder %s11, 7
    %p171 = pnand %p169, %p170
    %p172 = pneg %p171
    // Predicated region
    $region9: #{mi_net_forward_batched.1} parent=5 // pred_check
      _
    $region10: #{mi_net_forward_batched.1} parent=5 // pred_check_branch
      %174 = sbr.rel (%p171) target = $region12
    $region11: #{mi_net_forward_batched.1} parent=5 // pred_region
      %s175 = ssub.s32 %s11, 1
      // Predicated region
      $region13: #{mi_net_forward_batched.1} parent=11 // pred_check
        %p176 = pneg %p72
      $region14: #{mi_net_forward_batched.1} parent=11 // pred_check_branch
        %178 = sbr.rel (%p176) target = $region16
      $region15: #{mi_net_forward_batched.1} parent=11 // pred_region
        _
      $region16: #{mi_net_forward_batched.1} parent=11 // pred_fallthru
        _
      // Predicated region
      $region17: #{mi_net_forward_batched.1} parent=11 // pred_check
        %p179 = pneg %p93
      $region18: #{mi_net_forward_batched.1} parent=11 // pred_check_branch
        %181 = sbr.rel (%p179) target = $region20
      $region19: #{mi_net_forward_batched.1} parent=11 // pred_region
        _
      $region20: #{mi_net_forward_batched.1} parent=11 // pred_fallthru
        _
      // Predicated region
      $region21: #{mi_net_forward_batched.1} parent=11 // pred_check
        %p182 = pneg %p114
      $region22: #{mi_net_forward_batched.1} parent=11 // pred_check_branch
        %184 = sbr.rel (%p182) target = $region24
      $region23: #{mi_net_forward_batched.1} parent=11 // pred_region
        _
      $region24: #{mi_net_forward_batched.1} parent=11 // pred_fallthru
        _
      // Predicated region
      $region25: #{mi_net_forward_batched.1} parent=11 // pred_check
        %p185 = pneg %p135
      $region26: #{mi_net_forward_batched.1} parent=11 // pred_check_branch
        %187 = sbr.rel (%p185) target = $region28
      $region27: #{mi_net_forward_batched.1} parent=11 // pred_region
        _
      $region28: #{mi_net_forward_batched.1} parent=11 // pred_fallthru
        _
    $region12: #{mi_net_forward_batched.1} parent=5 // pred_fallthru
      _
    %p188 = scmp.lt.s32.totalorder %s11, 6
    // Predicated region
    $region29: #{mi_net_forward_batched.1} parent=5 // pred_check
      %p189 = pneg %p188
    $region30: #{mi_net_forward_batched.1} parent=5 // pred_check_branch
      %191 = sbr.rel (%p189) target = $region32
    $region31: #{mi_net_forward_batched.1} parent=5 // pred_region
      // Predicated region
      $region33: #{mi_net_forward_batched.1} parent=31 // pred_check
        %p192 = pneg %p45
      $region34: #{mi_net_forward_batched.1} parent=31 // pred_check_branch
        %194 = sbr.rel (%p192) target = $region36
      $region35: #{mi_net_forward_batched.1} parent=31 // pred_region
        %s195 = smul.u32 16, %s19
        %p196 = scmp.lt.s32.totalorder %s18, 2
        %s197 = scalar_select %p196, %s18, 2
        %p198 = scmp.lt.s32.totalorder %s195, 31
        %s199 = scalar_select %p198, %s195, 31
        %s200 = smul.addr %s197, 32
        %s201 = sadd.s32 %s199, %s200
        %s202 = smul.addr %s201, 8
        %s203 = scalar_lea.vmem %s0, %s202
        %s204 = smul.u32 16, %s19
      $region36: #{mi_net_forward_batched.1} parent=31 // pred_fallthru
        _
    $region32: #{mi_net_forward_batched.1} parent=5 // pred_fallthru
      _
    %p205 = scmp.le.s32.totalorder 1, %s11
    %p206 = scmp.lt.s32.totalorder %s11, 7
    %p207 = pnand %p205, %p206
    %p208 = pneg %p207
    // Predicated region
    $region37: #{mi_net_forward_batched.1} parent=5 // pred_check
      _
    $region38: #{mi_net_forward_batched.1} parent=5 // pred_check_branch
      %210 = sbr.rel (%p207) target = $region40
    $region39: #{mi_net_forward_batched.1} parent=5 // pred_region
      %s211 = ssub.s32 %s11, 1
      %s212 = smul.u32 16, %s21
      %p213 = scmp.lt.s32.totalorder %s20, 2
      %s214 = scalar_select %p213, %s20, 2
      %p215 = scmp.lt.s32.totalorder %s212, 31
      %s216 = scalar_select %p215, %s212, 31
      %s217 = smul.addr %s214, 32
      %s218 = sadd.s32 %s216, %s217
      %s219 = smul.addr %s218, 8
      %s220 = scalar_lea.vmem %s0, %s219
      %p221 = pneg %p51
      %p222 = pneg %p48
      %p223 = pneg %p72
      %p224 = pneg %p69
      %p225 = pneg %p93
      %p226 = pneg %p90
      %p227 = pneg %p114
      %p228 = pneg %p111
      %p229 = pneg %p135
      %p230 = pneg %p132
      %p231 = pneg %p161
      %p232 = pneg %p158
      %p233 = scmp.lt.s32.totalorder %s20, 2
      %s234 = scalar_select %p233, %s20, 2
      %s235 = smul.addr %s234, 8
      %s236 = scalar_lea.vmem %s5, %s235
      %s237 = smul.u32 16, %s21
      %p238 = scmp.lt.s32.totalorder %s20, 2
      %s239 = scalar_select %p238, %s20, 2
      %p240 = scmp.lt.s32.totalorder %s237, 31
      %s241 = scalar_select %p240, %s237, 31
      %s242 = smul.addr %s239, 32
      %s243 = sadd.s32 %s241, %s242
      %s244 = smul.addr %s243, 8
      %s245 = scalar_lea.vmem %s0, %s244
      %s246 = smul.u32 16, %s21
      %p247 = scmp.lt.s32.totalorder %s20, 2
      %s248 = scalar_select %p247, %s20, 2
      %s249 = smul.addr %s248, 8
      %s250 = scalar_lea.vmem %s5, %s249
      %v251 = vld [vmem:[%s245] sm:$0xff]
      %v252 = vld [vmem:[%s245 + $0x8] sm:$0xff]
      %v253 = vld [vmem:[%s245 + $0x10] sm:$0xff]
      %v254 = vld [vmem:[%s245 + $0x18] sm:$0xff]
      %v255 = vld [vmem:[%s245 + $0x20] sm:$0xff]
      %v256 = vld [vmem:[%s245 + $0x28] sm:$0xff]
      %v257 = vld [vmem:[%s245 + $0x30] sm:$0xff]
      %v258 = vld [vmem:[%s245 + $0x38] sm:$0xff]
      %v259 = vld [vmem:[%s245 + $0x40] sm:$0xff]
      %v260 = vld [vmem:[%s245 + $0x48] sm:$0xff]
      %v261 = vld [vmem:[%s245 + $0x50] sm:$0xff]
      %v262 = vld [vmem:[%s245 + $0x58] sm:$0xff]
      %v263 = vld [vmem:[%s245 + $0x60] sm:$0xff]
      %v264 = vld [vmem:[%s245 + $0x68] sm:$0xff]
      %v265 = vld [vmem:[%s245 + $0x70] sm:$0xff]
      %v266 = vld [vmem:[%s245 + $0x78] sm:$0xff]
      %v267 = vld [vmem:[%s1] sm:$0xff]
      %v268 = vld [vmem:[%s1 + $0x8] sm:$0xff]
      %v269 = vld [vmem:[%s1 + $0x10] sm:$0xff]
      %v270 = vld [vmem:[%s1 + $0x18] sm:$0xff]
      %v271 = vld [vmem:[%s1 + $0x20] sm:$0xff]
      %v272 = vld [vmem:[%s1 + $0x28] sm:$0xff]
      %v273 = vld [vmem:[%s1 + $0x30] sm:$0xff]
      %v274 = vld [vmem:[%s1 + $0x38] sm:$0xff]
      %v275 = vld [vmem:[%s1 + $0x40] sm:$0xff]
      %v276 = vld [vmem:[%s1 + $0x48] sm:$0xff]
      %v277 = vld [vmem:[%s1 + $0x50] sm:$0xff]
      %v278 = vld [vmem:[%s1 + $0x58] sm:$0xff]
      %v279 = vld [vmem:[%s1 + $0x60] sm:$0xff]
      %v280 = vld [vmem:[%s1 + $0x68] sm:$0xff]
      %v281 = vld [vmem:[%s1 + $0x70] sm:$0xff]
      %v282 = vld [vmem:[%s1 + $0x78] sm:$0xff]
      %v283 = vld [vmem:[%s1 + $0x80] sm:$0xff]
      %v284 = vld [vmem:[%s1 + $0x88] sm:$0xff]
      %v285 = vld [vmem:[%s1 + $0x90] sm:$0xff]
      %v286 = vld [vmem:[%s1 + $0x98] sm:$0xff]
      %v287 = vld [vmem:[%s1 + $0xa0] sm:$0xff]
      %v288 = vld [vmem:[%s1 + $0xa8] sm:$0xff]
      %v289 = vld [vmem:[%s1 + $0xb0] sm:$0xff]
      %v290 = vld [vmem:[%s1 + $0xb8] sm:$0xff]
      %v291 = vld [vmem:[%s1 + $0xc0] sm:$0xff]
      %v292 = vld [vmem:[%s1 + $0xc8] sm:$0xff]
      %v293 = vld [vmem:[%s1 + $0xd0] sm:$0xff]
      %v294 = vld [vmem:[%s1 + $0xd8] sm:$0xff]
      %v295 = vld [vmem:[%s1 + $0xe0] sm:$0xff]
      %v296 = vld [vmem:[%s1 + $0xe8] sm:$0xff]
      %v297 = vld [vmem:[%s1 + $0xf0] sm:$0xff]
      %v298 = vld [vmem:[%s1 + $0xf8] sm:$0xff]
      %299 = vmatprep.subr.mxu0 %v268
      %300 = vmatpush1.msra.mxu0 %v267
      %301 = vmatprep.subr.mxu0 %v270
      %302 = vmatpush1.msra.mxu0 %v269
      %303 = vmatprep.subr.mxu0 %v272
      %304 = vmatpush1.msra.mxu0 %v271
      %305 = vmatprep.subr.mxu0 %v274
      %306 = vmatpush1.msra.mxu0 %v273
      %307 = vmatprep.subr.mxu0 %v276
      %308 = vmatpush1.msra.mxu0 %v275
      %309 = vmatprep.subr.mxu0 %v278
      %310 = vmatpush1.msra.mxu0 %v277
      %311 = vmatprep.subr.mxu0 %v280
      %312 = vmatpush1.msra.mxu0 %v279
      %313 = vmatprep.subr.mxu0 %v282
      %314 = vmatpush1.msra.mxu0 %v281
      %315 = vmatprep.subr.mxu0 %v284
      %316 = vmatpush1.msra.mxu0 %v283
      %317 = vmatprep.subr.mxu0 %v286
      %318 = vmatpush1.msra.mxu0 %v285
      %319 = vmatprep.subr.mxu0 %v288
      %320 = vmatpush1.msra.mxu0 %v287
      %321 = vmatprep.subr.mxu0 %v290
      %322 = vmatpush1.msra.mxu0 %v289
      %323 = vmatprep.subr.mxu0 %v292
      %324 = vmatpush1.msra.mxu0 %v291
      %325 = vmatprep.subr.mxu0 %v294
      %326 = vmatpush1.msra.mxu0 %v293
      %327 = vmatprep.subr.mxu0 %v296
      %328 = vmatpush1.msra.mxu0 %v295
      %329 = vmatprep.subr.mxu0 %v298
      %330 = vmatpush1.msra.mxu0 %v297
      %331 = vmatprep.subr.mxu0 0.0
      %332 = vmatpush1.msra.mxu0 0.0
      %333 = vmatprep.subr.mxu0 0.0
      %334 = vmatpush1.msra.mxu0 0.0
      %335 = vmatprep.subr.mxu0 0.0
      %336 = vmatpush1.msra.mxu0 0.0
      %337 = vmatprep.subr.mxu0 0.0
      %338 = vmatpush1.msra.mxu0 0.0
      %339 = vmatprep.subr.mxu0 0.0
      %340 = vmatpush1.msra.mxu0 0.0
      %341 = vmatprep.subr.mxu0 0.0
      %342 = vmatpush1.msra.mxu0 0.0
      %343 = vmatprep.subr.mxu0 0.0
      %344 = vmatpush1.msra.mxu0 0.0
      %345 = vmatprep.subr.mxu0 0.0
      %346 = vmatpush1.msra.mxu0 0.0
      %347 = vmatprep.subr.mxu0 0.0
      %348 = vmatpush1.msra.mxu0 0.0
      %349 = vmatprep.subr.mxu0 0.0
      %350 = vmatpush1.msra.mxu0 0.0
      %351 = vmatprep.subr.mxu0 0.0
      %352 = vmatpush1.msra.mxu0 0.0
      %353 = vmatprep.subr.mxu0 0.0
      %354 = vmatpush1.msra.mxu0 0.0
      %355 = vmatprep.subr.mxu0 0.0
      %356 = vmatpush1.msra.mxu0 0.0
      %357 = vmatprep.subr.mxu0 0.0
      %358 = vmatpush1.msra.mxu0 0.0
      %359 = vmatprep.subr.mxu0 0.0
      %360 = vmatpush1.msra.mxu0 0.0
      %361 = vmatprep.subr.mxu0 0.0
      %362 = vmatpush1.msra.mxu0 0.0
      %363 = vmatprep.mubr.f32.mxu0 0.0
      %364 = vmatmul.mubr.f32.gmra.mrb[0].mxu0 %v251
      %v365 = vpop.f32.mrb[0].mxu0
      %v366 = vadd.f32 0.0, %v365
      %v367 = vpop.f32.mrb[0].mxu0
      %v368 = vadd.f32 0.0, %v367
      %369 = vmatprep.mubr.f32.mxu0 0.0
      %370 = vmatmul.mubr.f32.gmra.mrb[0].mxu0 %v252
      %v371 = vpop.f32.mrb[0].mxu0
      %v372 = vadd.f32 0.0, %v371
      %v373 = vpop.f32.mrb[0].mxu0
      %v374 = vadd.f32 0.0, %v373
      %375 = vmatprep.mubr.f32.mxu0 0.0
      %376 = vmatmul.mubr.f32.gmra.mrb[0].mxu0 %v253
      %v377 = vpop.f32.mrb[0].mxu0
      %v378 = vadd.f32 0.0, %v377
      %v379 = vpop.f32.mrb[0].mxu0
      %v380 = vadd.f32 0.0, %v379
      %381 = vmatprep.mubr.f32.mxu0 0.0
      %382 = vmatmul.mubr.f32.gmra.mrb[0].mxu0 %v254
      %v383 = vpop.f32.mrb[0].mxu0
      %v384 = vadd.f32 0.0, %v383
      %v385 = vpop.f32.mrb[0].mxu0
      %v386 = vadd.f32 0.0, %v385
      %387 = vmatprep.mubr.f32.mxu0 0.0
      %388 = vmatmul.mubr.f32.gmra.mrb[0].mxu0 %v255
      %v389 = vpop.f32.mrb[0].mxu0
      %v390 = vadd.f32 0.0, %v389
      %v391 = vpop.f32.mrb[0].mxu0
      %v392 = vadd.f32 0.0, %v391
      %393 = vmatprep.mubr.f32.mxu0 0.0
      %394 = vmatmul.mubr.f32.gmra.mrb[0].mxu0 %v256
      %v395 = vpop.f32.mrb[0].mxu0
      %v396 = vadd.f32 0.0, %v395
      %v397 = vpop.f32.mrb[0].mxu0
      %v398 = vadd.f32 0.0, %v397
      %399 = vmatprep.mubr.f32.mxu0 0.0
      %400 = vmatmul.mubr.f32.gmra.mrb[0].mxu0 %v257
      %v401 = vpop.f32.mrb[0].mxu0
      %v402 = vadd.f32 0.0, %v401
      %v403 = vpop.f32.mrb[0].mxu0
      %v404 = vadd.f32 0.0, %v403
      %405 = vmatprep.mubr.f32.mxu0 0.0
      %406 = vmatmul.mubr.f32.gmra.mrb[0].mxu0 %v258
      %v407 = vpop.f32.mrb[0].mxu0
      %v408 = vadd.f32 0.0, %v407
      %v409 = vpop.f32.mrb[0].mxu0
      %v410 = vadd.f32 0.0, %v409
      %411 = vmatprep.mubr.f32.mxu0 0.0
      %412 = vmatmul.mubr.f32.gmra.mrb[0].mxu0 %v259
      %v413 = vpop.f32.mrb[0].mxu0
      %v414 = vadd.f32 0.0, %v413
      %v415 = vpop.f32.mrb[0].mxu0
      %v416 = vadd.f32 0.0, %v415
      %417 = vmatprep.mubr.f32.mxu0 0.0
      %418 = vmatmul.mubr.f32.gmra.mrb[0].mxu0 %v260
      %v419 = vpop.f32.mrb[0].mxu0
      %v420 = vadd.f32 0.0, %v419
      %v421 = vpop.f32.mrb[0].mxu0
      %v422 = vadd.f32 0.0, %v421
      %423 = vmatprep.mubr.f32.mxu0 0.0
      %424 = vmatmul.mubr.f32.gmra.mrb[0].mxu0 %v261
      %v425 = vpop.f32.mrb[0].mxu0
      %v426 = vadd.f32 0.0, %v425
      %v427 = vpop.f32.mrb[0].mxu0
      %v428 = vadd.f32 0.0, %v427
      %429 = vmatprep.mubr.f32.mxu0 0.0
      %430 = vmatmul.mubr.f32.gmra.mrb[0].mxu0 %v262
      %v431 = vpop.f32.mrb[0].mxu0
      %v432 = vadd.f32 0.0, %v431
      %v433 = vpop.f32.mrb[0].mxu0
      %v434 = vadd.f32 0.0, %v433
      %435 = vmatprep.mubr.f32.mxu0 0.0
      %436 = vmatmul.mubr.f32.gmra.mrb[0].mxu0 %v263
      %v437 = vpop.f32.mrb[0].mxu0
      %v438 = vadd.f32 0.0, %v437
      %v439 = vpop.f32.mrb[0].mxu0
      %v440 = vadd.f32 0.0, %v439
      %441 = vmatprep.mubr.f32.mxu0 0.0
      %442 = vmatmul.mubr.f32.gmra.mrb[0].mxu0 %v264
      %v443 = vpop.f32.mrb[0].mxu0
      %v444 = vadd.f32 0.0, %v443
      %v445 = vpop.f32.mrb[0].mxu0
      %v446 = vadd.f32 0.0, %v445
      %447 = vmatprep.mubr.f32.mxu0 0.0
      %448 = vmatmul.mubr.f32.gmra.mrb[0].mxu0 %v265
      %v449 = vpop.f32.mrb[0].mxu0
      %v450 = vadd.f32 0.0, %v449
      %v451 = vpop.f32.mrb[0].mxu0
      %v452 = vadd.f32 0.0, %v451
      %453 = vmatprep.mubr.f32.mxu0 0.0
      %454 = vmatmul.mubr.f32.gmra.mrb[0].mxu0 %v266
      %v455 = vpop.f32.mrb[0].mxu0
      %v456 = vadd.f32 0.0, %v455
      %v457 = vpop.f32.mrb[0].mxu0
      %v458 = vadd.f32 0.0, %v457
      %459 = vdwg.mxu0
      %v460 = vmax.f32 %v366, 0.0
      %v461 = vmax.f32 %v368, 0.0
      %v462 = vmax.f32 %v372, 0.0
      %v463 = vmax.f32 %v374, 0.0
      %v464 = vmax.f32 %v378, 0.0
      %v465 = vmax.f32 %v380, 0.0
      %v466 = vmax.f32 %v384, 0.0
      %v467 = vmax.f32 %v386, 0.0
      %v468 = vmax.f32 %v390, 0.0
      %v469 = vmax.f32 %v392, 0.0
      %v470 = vmax.f32 %v396, 0.0
      %v471 = vmax.f32 %v398, 0.0
      %v472 = vmax.f32 %v402, 0.0
      %v473 = vmax.f32 %v404, 0.0
      %v474 = vmax.f32 %v408, 0.0
      %v475 = vmax.f32 %v410, 0.0
      %v476 = vmax.f32 %v414, 0.0
      %v477 = vmax.f32 %v416, 0.0
      %v478 = vmax.f32 %v420, 0.0
      %v479 = vmax.f32 %v422, 0.0
      %v480 = vmax.f32 %v426, 0.0
      %v481 = vmax.f32 %v428, 0.0
      %v482 = vmax.f32 %v432, 0.0
      %v483 = vmax.f32 %v434, 0.0
      %v484 = vmax.f32 %v438, 0.0
      %v485 = vmax.f32 %v440, 0.0
      %v486 = vmax.f32 %v444, 0.0
      %v487 = vmax.f32 %v446, 0.0
      %v488 = vmax.f32 %v450, 0.0
      %v489 = vmax.f32 %v452, 0.0
      %v490 = vmax.f32 %v456, 0.0
      %v491 = vmax.f32 %v458, 0.0
      %v492 = vld [vmem:[%s2] sm:$0xff]
      %v493 = vld [vmem:[%s2 + $0x8] sm:$0xff]
      %v494 = vld [vmem:[%s2 + $0x10] sm:$0xff]
      %v495 = vld [vmem:[%s2 + $0x18] sm:$0xff]
      %v496 = vld [vmem:[%s2 + $0x20] sm:$0xff]
      %v497 = vld [vmem:[%s2 + $0x28] sm:$0xff]
      %v498 = vld [vmem:[%s2 + $0x30] sm:$0xff]
      %v499 = vld [vmem:[%s2 + $0x38] sm:$0xff]
      %v500 = vld [vmem:[%s2 + $0x40] sm:$0xff]
      %v501 = vld [vmem:[%s2 + $0x48] sm:$0xff]
      %v502 = vld [vmem:[%s2 + $0x50] sm:$0xff]
      %v503 = vld [vmem:[%s2 + $0x58] sm:$0xff]
      %v504 = vld [vmem:[%s2 + $0x60] sm:$0xff]
      %v505 = vld [vmem:[%s2 + $0x68] sm:$0xff]
      %v506 = vld [vmem:[%s2 + $0x70] sm:$0xff]
      %v507 = vld [vmem:[%s2 + $0x78] sm:$0xff]
      %v508 = vld [vmem:[%s2 + $0x80] sm:$0xff]
      %v509 = vld [vmem:[%s2 + $0x88] sm:$0xff]
      %v510 = vld [vmem:[%s2 + $0x90] sm:$0xff]
      %v511 = vld [vmem:[%s2 + $0x98] sm:$0xff]
      %v512 = vld [vmem:[%s2 + $0xa0] sm:$0xff]
      %v513 = vld [vmem:[%s2 + $0xa8] sm:$0xff]
      %v514 = vld [vmem:[%s2 + $0xb0] sm:$0xff]
      %v515 = vld [vmem:[%s2 + $0xb8] sm:$0xff]
      %v516 = vld [vmem:[%s2 + $0xc0] sm:$0xff]
      %v517 = vld [vmem:[%s2 + $0xc8] sm:$0xff]
      %v518 = vld [vmem:[%s2 + $0xd0] sm:$0xff]
      %v519 = vld [vmem:[%s2 + $0xd8] sm:$0xff]
      %v520 = vld [vmem:[%s2 + $0xe0] sm:$0xff]
      %v521 = vld [vmem:[%s2 + $0xe8] sm:$0xff]
      %v522 = vld [vmem:[%s2 + $0xf0] sm:$0xff]
      %v523 = vld [vmem:[%s2 + $0xf8] sm:$0xff]
      %524 = vmatprep.subr.mxu0 0.0
      %525 = vmatpush1.msra.mxu0 %v492
      %526 = vmatprep.subr.mxu0 0.0
      %527 = vmatpush1.msra.mxu0 %v493
      %528 = vmatprep.subr.mxu0 0.0
      %529 = vmatpush1.msra.mxu0 %v494
      %530 = vmatprep.subr.mxu0 0.0
      %531 = vmatpush1.msra.mxu0 %v495
      %532 = vmatprep.subr.mxu0 0.0
      %533 = vmatpush1.msra.mxu0 %v496
      %534 = vmatprep.subr.mxu0 0.0
      %535 = vmatpush1.msra.mxu0 %v497
      %536 = vmatprep.subr.mxu0 0.0
      %537 = vmatpush1.msra.mxu0 %v498
      %538 = vmatprep.subr.mxu0 0.0
      %539 = vmatpush1.msra.mxu0 %v499
      %540 = vmatprep.subr.mxu0 0.0
      %541 = vmatpush1.msra.mxu0 %v500
      %542 = vmatprep.subr.mxu0 0.0
      %543 = vmatpush1.msra.mxu0 %v501
      %544 = vmatprep.subr.mxu0 0.0
      %545 = vmatpush1.msra.mxu0 %v502
      %546 = vmatprep.subr.mxu0 0.0
      %547 = vmatpush1.msra.mxu0 %v503
      %548 = vmatprep.subr.mxu0 0.0
      %549 = vmatpush1.msra.mxu0 %v504
      %550 = vmatprep.subr.mxu0 0.0
      %551 = vmatpush1.msra.mxu0 %v505
      %552 = vmatprep.subr.mxu0 0.0
      %553 = vmatpush1.msra.mxu0 %v506
      %554 = vmatprep.subr.mxu0 0.0
      %555 = vmatpush1.msra.mxu0 %v507
      %556 = vmatprep.subr.mxu0 0.0
      %557 = vmatpush1.msra.mxu0 %v508
      %558 = vmatprep.subr.mxu0 0.0
      %559 = vmatpush1.msra.mxu0 %v509
      %560 = vmatprep.subr.mxu0 0.0
      %561 = vmatpush1.msra.mxu0 %v510
      %562 = vmatprep.subr.mxu0 0.0
      %563 = vmatpush1.msra.mxu0 %v511
      %564 = vmatprep.subr.mxu0 0.0
      %565 = vmatpush1.msra.mxu0 %v512
      %566 = vmatprep.subr.mxu0 0.0
      %567 = vmatpush1.msra.mxu0 %v513
      %568 = vmatprep.subr.mxu0 0.0
      %569 = vmatpush1.msra.mxu0 %v514
      %570 = vmatprep.subr.mxu0 0.0
      %571 = vmatpush1.msra.mxu0 %v515
      %572 = vmatprep.subr.mxu0 0.0
      %573 = vmatpush1.msra.mxu0 %v516
      %574 = vmatprep.subr.mxu0 0.0
      %575 = vmatpush1.msra.mxu0 %v517
      %576 = vmatprep.subr.mxu0 0.0
      %577 = vmatpush1.msra.mxu0 %v518
      %578 = vmatprep.subr.mxu0 0.0
      %579 = vmatpush1.msra.mxu0 %v519
      %580 = vmatprep.subr.mxu0 0.0
      %581 = vmatpush1.msra.mxu0 %v520
      %582 = vmatprep.subr.mxu0 0.0
      %583 = vmatpush1.msra.mxu0 %v521
      %584 = vmatprep.subr.mxu0 0.0
      %585 = vmatpush1.msra.mxu0 %v522
      %586 = vmatprep.subr.mxu0 0.0
      %587 = vmatpush1.msra.mxu0 %v523
      %588 = vmatprep.mubr.f32.mxu0 %v461
      %589 = vmatmul.mubr.f32.gmra.mrb[0].mxu0 %v460
      %v590 = vpop.f32.mrb[0].mxu0
      %v591 = vadd.f32 0.0, %v590
      %v592 = vpop.f32.mrb[0].mxu0
      %593 = vmatprep.mubr.f32.mxu0 %v463
      %594 = vmatmul.mubr.f32.gmra.mrb[0].mxu0 %v462
      %v595 = vpop.f32.mrb[0].mxu0
      %v596 = vadd.f32 0.0, %v595
      %v597 = vpop.f32.mrb[0].mxu0
      %598 = vmatprep.mubr.f32.mxu0 %v465
      %599 = vmatmul.mubr.f32.gmra.mrb[0].mxu0 %v464
      %v600 = vpop.f32.mrb[0].mxu0
      %v601 = vadd.f32 0.0, %v600
      %v602 = vpop.f32.mrb[0].mxu0
      %603 = vmatprep.mubr.f32.mxu0 %v467
      %604 = vmatmul.mubr.f32.gmra.mrb[0].mxu0 %v466
      %v605 = vpop.f32.mrb[0].mxu0
      %v606 = vadd.f32 0.0, %v605
      %v607 = vpop.f32.mrb[0].mxu0
      %608 = vmatprep.mubr.f32.mxu0 %v469
      %609 = vmatmul.mubr.f32.gmra.mrb[0].mxu0 %v468
      %v610 = vpop.f32.mrb[0].mxu0
      %v611 = vadd.f32 0.0, %v610
      %v612 = vpop.f32.mrb[0].mxu0
      %613 = vmatprep.mubr.f32.mxu0 %v471
      %614 = vmatmul.mubr.f32.gmra.mrb[0].mxu0 %v470
      %v615 = vpop.f32.mrb[0].mxu0
      %v616 = vadd.f32 0.0, %v615
      %v617 = vpop.f32.mrb[0].mxu0
      %618 = vmatprep.mubr.f32.mxu0 %v473
      %619 = vmatmul.mubr.f32.gmra.mrb[0].mxu0 %v472
      %v620 = vpop.f32.mrb[0].mxu0
      %v621 = vadd.f32 0.0, %v620
      %v622 = vpop.f32.mrb[0].mxu0
      %623 = vmatprep.mubr.f32.mxu0 %v475
      %624 = vmatmul.mubr.f32.gmra.mrb[0].mxu0 %v474
      %v625 = vpop.f32.mrb[0].mxu0
      %v626 = vadd.f32 0.0, %v625
      %v627 = vpop.f32.mrb[0].mxu0
      %628 = vmatprep.mubr.f32.mxu0 %v477
      %629 = vmatmul.mubr.f32.gmra.mrb[0].mxu0 %v476
      %v630 = vpop.f32.mrb[0].mxu0
      %v631 = vadd.f32 0.0, %v630
      %v632 = vpop.f32.mrb[0].mxu0
      %633 = vmatprep.mubr.f32.mxu0 %v479
      %634 = vmatmul.mubr.f32.gmra.mrb[0].mxu0 %v478
      %v635 = vpop.f32.mrb[0].mxu0
      %v636 = vadd.f32 0.0, %v635
      %v637 = vpop.f32.mrb[0].mxu0
      %638 = vmatprep.mubr.f32.mxu0 %v481
      %639 = vmatmul.mubr.f32.gmra.mrb[0].mxu0 %v480
      %v640 = vpop.f32.mrb[0].mxu0
      %v641 = vadd.f32 0.0, %v640
      %v642 = vpop.f32.mrb[0].mxu0
      %643 = vmatprep.mubr.f32.mxu0 %v483
      %644 = vmatmul.mubr.f32.gmra.mrb[0].mxu0 %v482
      %v645 = vpop.f32.mrb[0].mxu0
      %v646 = vadd.f32 0.0, %v645
      %v647 = vpop.f32.mrb[0].mxu0
      %648 = vmatprep.mubr.f32.mxu0 %v485
      %649 = vmatmul.mubr.f32.gmra.mrb[0].mxu0 %v484
      %v650 = vpop.f32.mrb[0].mxu0
      %v651 = vadd.f32 0.0, %v650
      %v652 = vpop.f32.mrb[0].mxu0
      %653 = vmatprep.mubr.f32.mxu0 %v487
      %654 = vmatmul.mubr.f32.gmra.mrb[0].mxu0 %v486
      %v655 = vpop.f32.mrb[0].mxu0
      %v656 = vadd.f32 0.0, %v655
      %v657 = vpop.f32.mrb[0].mxu0
      %658 = vmatprep.mubr.f32.mxu0 %v489
      %659 = vmatmul.mubr.f32.gmra.mrb[0].mxu0 %v488
      %v660 = vpop.f32.mrb[0].mxu0
      %v661 = vadd.f32 0.0, %v660
      %v662 = vpop.f32.mrb[0].mxu0
      %663 = vmatprep.mubr.f32.mxu0 %v491
      %664 = vmatmul.mubr.f32.gmra.mrb[0].mxu0 %v490
      %v665 = vpop.f32.mrb[0].mxu0
      %v666 = vadd.f32 0.0, %v665
      %v667 = vpop.f32.mrb[0].mxu0
      %668 = vdwg.mxu0
      %v669 = vmax.f32 %v591, 0.0
      %v670 = vmax.f32 %v596, 0.0
      %v671 = vmax.f32 %v601, 0.0
      %v672 = vmax.f32 %v606, 0.0
      %v673 = vmax.f32 %v611, 0.0
      %v674 = vmax.f32 %v616, 0.0
      %v675 = vmax.f32 %v621, 0.0
      %v676 = vmax.f32 %v626, 0.0
      %v677 = vmax.f32 %v631, 0.0
      %v678 = vmax.f32 %v636, 0.0
      %v679 = vmax.f32 %v641, 0.0
      %v680 = vmax.f32 %v646, 0.0
      %v681 = vmax.f32 %v651, 0.0
      %v682 = vmax.f32 %v656, 0.0
      %v683 = vmax.f32 %v661, 0.0
      %v684 = vmax.f32 %v666, 0.0
      %v685 = vld [vmem:[%s3] sm:$0xff]
      %v686 = vld [vmem:[%s3 + $0x8] sm:$0xff]
      %v687 = vld [vmem:[%s3 + $0x10] sm:$0xff]
      %v688 = vld [vmem:[%s3 + $0x18] sm:$0xff]
      %v689 = vld [vmem:[%s3 + $0x20] sm:$0xff]
      %v690 = vld [vmem:[%s3 + $0x28] sm:$0xff]
      %v691 = vld [vmem:[%s3 + $0x30] sm:$0xff]
      %v692 = vld [vmem:[%s3 + $0x38] sm:$0xff]
      %v693 = vld [vmem:[%s3 + $0x40] sm:$0xff]
      %v694 = vld [vmem:[%s3 + $0x48] sm:$0xff]
      %v695 = vld [vmem:[%s3 + $0x50] sm:$0xff]
      %v696 = vld [vmem:[%s3 + $0x58] sm:$0xff]
      %v697 = vld [vmem:[%s3 + $0x60] sm:$0xff]
      %v698 = vld [vmem:[%s3 + $0x68] sm:$0xff]
      %v699 = vld [vmem:[%s3 + $0x70] sm:$0xff]
      %v700 = vld [vmem:[%s3 + $0x78] sm:$0xff]
      %701 = vmatprep.subr.mxu0 0.0
      %702 = vmatpush1.msra.mxu0 %v685
      %703 = vmatprep.subr.mxu0 0.0
      %704 = vmatpush1.msra.mxu0 %v686
      %705 = vmatprep.subr.mxu0 0.0
      %706 = vmatpush1.msra.mxu0 %v687
      %707 = vmatprep.subr.mxu0 0.0
      %708 = vmatpush1.msra.mxu0 %v688
      %709 = vmatprep.subr.mxu0 0.0
      %710 = vmatpush1.msra.mxu0 %v689
      %711 = vmatprep.subr.mxu0 0.0
      %712 = vmatpush1.msra.mxu0 %v690
      %713 = vmatprep.subr.mxu0 0.0
      %714 = vmatpush1.msra.mxu0 %v691
      %715 = vmatprep.subr.mxu0 0.0
      %716 = vmatpush1.msra.mxu0 %v692
      %717 = vmatprep.subr.mxu0 0.0
      %718 = vmatpush1.msra.mxu0 %v693
      %719 = vmatprep.subr.mxu0 0.0
      %720 = vmatpush1.msra.mxu0 %v694
      %721 = vmatprep.subr.mxu0 0.0
      %722 = vmatpush1.msra.mxu0 %v695
      %723 = vmatprep.subr.mxu0 0.0
      %724 = vmatpush1.msra.mxu0 %v696
      %725 = vmatprep.subr.mxu0 0.0
      %726 = vmatpush1.msra.mxu0 %v697
      %727 = vmatprep.subr.mxu0 0.0
      %728 = vmatpush1.msra.mxu0 %v698
      %729 = vmatprep.subr.mxu0 0.0
      %730 = vmatpush1.msra.mxu0 %v699
      %731 = vmatprep.subr.mxu0 0.0
      %732 = vmatpush1.msra.mxu0 %v700
      %733 = vmatprep.subr.mxu0 0.0
      %734 = vmatpush1.msra.mxu0 0.0
      %735 = vmatprep.subr.mxu0 0.0
      %736 = vmatpush1.msra.mxu0 0.0
      %737 = vmatprep.subr.mxu0 0.0
      %738 = vmatpush1.msra.mxu0 0.0
      %739 = vmatprep.subr.mxu0 0.0
      %740 = vmatpush1.msra.mxu0 0.0
      %741 = vmatprep.subr.mxu0 0.0
      %742 = vmatpush1.msra.mxu0 0.0
      %743 = vmatprep.subr.mxu0 0.0
      %744 = vmatpush1.msra.mxu0 0.0
      %745 = vmatprep.subr.mxu0 0.0
      %746 = vmatpush1.msra.mxu0 0.0
      %747 = vmatprep.subr.mxu0 0.0
      %748 = vmatpush1.msra.mxu0 0.0
      %749 = vmatprep.subr.mxu0 0.0
      %750 = vmatpush1.msra.mxu0 0.0
      %751 = vmatprep.subr.mxu0 0.0
      %752 = vmatpush1.msra.mxu0 0.0
      %753 = vmatprep.subr.mxu0 0.0
      %754 = vmatpush1.msra.mxu0 0.0
      %755 = vmatprep.subr.mxu0 0.0
      %756 = vmatpush1.msra.mxu0 0.0
      %757 = vmatprep.subr.mxu0 0.0
      %758 = vmatpush1.msra.mxu0 0.0
      %759 = vmatprep.subr.mxu0 0.0
      %760 = vmatpush1.msra.mxu0 0.0
      %761 = vmatprep.subr.mxu0 0.0
      %762 = vmatpush1.msra.mxu0 0.0
      %763 = vmatprep.subr.mxu0 0.0
      %764 = vmatpush1.msra.mxu0 0.0
      %765 = vmatprep.mubr.f32.mxu0 0.0
      %766 = vmatmul.mubr.f32.gmra.mrb[0].mxu0 %v669
      %v767 = vpop.f32.mrb[0].mxu0
      %v768 = vadd.f32 0.0, %v767
      %v769 = vpop.f32.mrb[0].mxu0
      %770 = vmatprep.mubr.f32.mxu0 0.0
      %771 = vmatmul.mubr.f32.gmra.mrb[0].mxu0 %v670
      %v772 = vpop.f32.mrb[0].mxu0
      %v773 = vadd.f32 0.0, %v772
      %v774 = vpop.f32.mrb[0].mxu0
      %775 = vmatprep.mubr.f32.mxu0 0.0
      %776 = vmatmul.mubr.f32.gmra.mrb[0].mxu0 %v671
      %v777 = vpop.f32.mrb[0].mxu0
      %v778 = vadd.f32 0.0, %v777
      %v779 = vpop.f32.mrb[0].mxu0
      %780 = vmatprep.mubr.f32.mxu0 0.0
      %781 = vmatmul.mubr.f32.gmra.mrb[0].mxu0 %v672
      %v782 = vpop.f32.mrb[0].mxu0
      %v783 = vadd.f32 0.0, %v782
      %v784 = vpop.f32.mrb[0].mxu0
      %785 = vmatprep.mubr.f32.mxu0 0.0
      %786 = vmatmul.mubr.f32.gmra.mrb[0].mxu0 %v673
      %v787 = vpop.f32.mrb[0].mxu0
      %v788 = vadd.f32 0.0, %v787
      %v789 = vpop.f32.mrb[0].mxu0
      %790 = vmatprep.mubr.f32.mxu0 0.0
      %791 = vmatmul.mubr.f32.gmra.mrb[0].mxu0 %v674
      %v792 = vpop.f32.mrb[0].mxu0
      %v793 = vadd.f32 0.0, %v792
      %v794 = vpop.f32.mrb[0].mxu0
      %795 = vmatprep.mubr.f32.mxu0 0.0
      %796 = vmatmul.mubr.f32.gmra.mrb[0].mxu0 %v675
      %v797 = vpop.f32.mrb[0].mxu0
      %v798 = vadd.f32 0.0, %v797
      %v799 = vpop.f32.mrb[0].mxu0
      %800 = vmatprep.mubr.f32.mxu0 0.0
      %801 = vmatmul.mubr.f32.gmra.mrb[0].mxu0 %v676
      %v802 = vpop.f32.mrb[0].mxu0
      %v803 = vadd.f32 0.0, %v802
      %v804 = vpop.f32.mrb[0].mxu0
      %805 = vmatprep.mubr.f32.mxu0 0.0
      %806 = vmatmul.mubr.f32.gmra.mrb[0].mxu0 %v677
      %v807 = vpop.f32.mrb[0].mxu0
      %v808 = vadd.f32 0.0, %v807
      %v809 = vpop.f32.mrb[0].mxu0
      %810 = vmatprep.mubr.f32.mxu0 0.0
      %811 = vmatmul.mubr.f32.gmra.mrb[0].mxu0 %v678
      %v812 = vpop.f32.mrb[0].mxu0
      %v813 = vadd.f32 0.0, %v812
      %v814 = vpop.f32.mrb[0].mxu0
      %815 = vmatprep.mubr.f32.mxu0 0.0
      %816 = vmatmul.mubr.f32.gmra.mrb[0].mxu0 %v679
      %v817 = vpop.f32.mrb[0].mxu0
      %v818 = vadd.f32 0.0, %v817
      %v819 = vpop.f32.mrb[0].mxu0
      %820 = vmatprep.mubr.f32.mxu0 0.0
      %821 = vmatmul.mubr.f32.gmra.mrb[0].mxu0 %v680
      %v822 = vpop.f32.mrb[0].mxu0
      %v823 = vadd.f32 0.0, %v822
      %v824 = vpop.f32.mrb[0].mxu0
      %825 = vmatprep.mubr.f32.mxu0 0.0
      %826 = vmatmul.mubr.f32.gmra.mrb[0].mxu0 %v681
      %v827 = vpop.f32.mrb[0].mxu0
      %v828 = vadd.f32 0.0, %v827
      %v829 = vpop.f32.mrb[0].mxu0
      %830 = vmatprep.mubr.f32.mxu0 0.0
      %831 = vmatmul.mubr.f32.gmra.mrb[0].mxu0 %v682
      %v832 = vpop.f32.mrb[0].mxu0
      %v833 = vadd.f32 0.0, %v832
      %v834 = vpop.f32.mrb[0].mxu0
      %835 = vmatprep.mubr.f32.mxu0 0.0
      %836 = vmatmul.mubr.f32.gmra.mrb[0].mxu0 %v683
      %v837 = vpop.f32.mrb[0].mxu0
      %v838 = vadd.f32 0.0, %v837
      %v839 = vpop.f32.mrb[0].mxu0
      %840 = vmatprep.mubr.f32.mxu0 0.0
      %841 = vmatmul.mubr.f32.gmra.mrb[0].mxu0 %v684
      %v842 = vpop.f32.mrb[0].mxu0
      %v843 = vadd.f32 0.0, %v842
      %v844 = vpop.f32.mrb[0].mxu0
      %845 = vdwg.mxu0
      %v846 = vmax.f32 %v768, 0.0
      %v847 = vmax.f32 %v773, 0.0
      %v848 = vmax.f32 %v778, 0.0
      %v849 = vmax.f32 %v783, 0.0
      %v850 = vmax.f32 %v788, 0.0
      %v851 = vmax.f32 %v793, 0.0
      %v852 = vmax.f32 %v798, 0.0
      %v853 = vmax.f32 %v803, 0.0
      %v854 = vmax.f32 %v808, 0.0
      %v855 = vmax.f32 %v813, 0.0
      %v856 = vmax.f32 %v818, 0.0
      %v857 = vmax.f32 %v823, 0.0
      %v858 = vmax.f32 %v828, 0.0
      %v859 = vmax.f32 %v833, 0.0
      %v860 = vmax.f32 %v838, 0.0
      %v861 = vmax.f32 %v843, 0.0
      %v862 = vld [vmem:[%s4] sm:$0x1]
      %v864 = vlaneseq
      %v865 = vshrl.u32 %v864, 7
      %v866 = vsub.s32 0, %v865
      %v867 = vrot.slane %v862, %v866
      %v869 = vmul.f32 %v846, %v867
      %v870 = vmul.f32 %v847, %v867
      %v871 = vmul.f32 %v848, %v867
      %v872 = vmul.f32 %v849, %v867
      %v873 = vmul.f32 %v850, %v867
      %v874 = vmul.f32 %v851, %v867
      %v875 = vmul.f32 %v852, %v867
      %v876 = vmul.f32 %v853, %v867
      %v877 = vmul.f32 %v854, %v867
      %v878 = vmul.f32 %v855, %v867
      %v879 = vmul.f32 %v856, %v867
      %v880 = vmul.f32 %v857, %v867
      %v881 = vmul.f32 %v858, %v867
      %v882 = vmul.f32 %v859, %v867
      %v883 = vmul.f32 %v860, %v867
      %v884 = vmul.f32 %v861, %v867
      %vm885 = vcmask 523264
      %v886 = vsel %vm885, %v869, 0.0
      %887 = vadd.xlane.f32.xlu0 %v886
      %v888 = vpop.xlane.xlu0 %887
      %v889 = vsel %vm885, %v870, 0.0
      %890 = vadd.xlane.f32.xlu0 %v889
      %v891 = vpop.xlane.xlu0 %890
      %v892 = vsel %vm885, %v871, 0.0
      %893 = vadd.xlane.f32.xlu0 %v892
      %v894 = vpop.xlane.xlu0 %893
      %v895 = vsel %vm885, %v872, 0.0
      %896 = vadd.xlane.f32.xlu0 %v895
      %v897 = vpop.xlane.xlu0 %896
      %v898 = vsel %vm885, %v873, 0.0
      %899 = vadd.xlane.f32.xlu0 %v898
      %v900 = vpop.xlane.xlu0 %899
      %v901 = vsel %vm885, %v874, 0.0
      %902 = vadd.xlane.f32.xlu0 %v901
      %v903 = vpop.xlane.xlu0 %902
      %v904 = vsel %vm885, %v875, 0.0
      %905 = vadd.xlane.f32.xlu0 %v904
      %v906 = vpop.xlane.xlu0 %905
      %v907 = vsel %vm885, %v876, 0.0
      %908 = vadd.xlane.f32.xlu0 %v907
      %v909 = vpop.xlane.xlu0 %908
      %v910 = vsel %vm885, %v877, 0.0
      %911 = vadd.xlane.f32.xlu0 %v910
      %v912 = vpop.xlane.xlu0 %911
      %v913 = vsel %vm885, %v878, 0.0
      %914 = vadd.xlane.f32.xlu0 %v913
      %v915 = vpop.xlane.xlu0 %914
      %v916 = vsel %vm885, %v879, 0.0
      %917 = vadd.xlane.f32.xlu0 %v916
      %v918 = vpop.xlane.xlu0 %917
      %v919 = vsel %vm885, %v880, 0.0
      %920 = vadd.xlane.f32.xlu0 %v919
      %v921 = vpop.xlane.xlu0 %920
      %v922 = vsel %vm885, %v881, 0.0
      %923 = vadd.xlane.f32.xlu0 %v922
      %v924 = vpop.xlane.xlu0 %923
      %v925 = vsel %vm885, %v882, 0.0
      %926 = vadd.xlane.f32.xlu0 %v925
      %v927 = vpop.xlane.xlu0 %926
      %v928 = vsel %vm885, %v883, 0.0
      %929 = vadd.xlane.f32.xlu0 %v928
      %v930 = vpop.xlane.xlu0 %929
      %v931 = vsel %vm885, %v884, 0.0
      %932 = vadd.xlane.f32.xlu0 %v931
      %v933 = vpop.xlane.xlu0 %932
      %s934 = smul.u32 %s21, 128
      %v935 = vlaneseq
      %v936 = vshrl.u32 %v935, 7
      %v937 = vadd.s32 %v936, 8
      %v938 = vadd.s32 %v936, 16
      %v939 = vadd.s32 %v936, 24
      %v940 = vadd.s32 %v936, 32
      %v941 = vadd.s32 %v936, 40
      %v942 = vadd.s32 %v936, 48
      %v943 = vadd.s32 %v936, 56
      %v944 = vadd.s32 %v936, 64
      %v945 = vadd.s32 %v936, 72
      %v946 = vadd.s32 %v936, 80
      %v947 = vadd.s32 %v936, 88
      %v948 = vadd.s32 %v936, 96
      %v949 = vadd.s32 %v936, 104
      %v950 = vadd.s32 %v936, 112
      %v951 = vadd.s32 %v936, 120
      %v952 = vstv %s934
      %v953 = vadd.s32 %v952, %v936
      %v954 = vadd.s32 %v952, %v937
      %v955 = vadd.s32 %v952, %v938
      %v956 = vadd.s32 %v952, %v939
      %v957 = vadd.s32 %v952, %v940
      %v958 = vadd.s32 %v952, %v941
      %v959 = vadd.s32 %v952, %v942
      %v960 = vadd.s32 %v952, %v943
      %v961 = vadd.s32 %v952, %v944
      %v962 = vadd.s32 %v952, %v945
      %v963 = vadd.s32 %v952, %v946
      %v964 = vadd.s32 %v952, %v947
      %v965 = vadd.s32 %v952, %v948
      %v966 = vadd.s32 %v952, %v949
      %v967 = vadd.s32 %v952, %v950
      %v968 = vadd.s32 %v952, %v951
      %vm969 = vcmp.lt.s32.totalorder %v953, 200
      %vm970 = vcmp.lt.s32.totalorder %v954, 200
      %vm971 = vcmp.lt.s32.totalorder %v955, 200
      %vm972 = vcmp.lt.s32.totalorder %v956, 200
      %vm973 = vcmp.lt.s32.totalorder %v957, 200
      %vm974 = vcmp.lt.s32.totalorder %v958, 200
      %vm975 = vcmp.lt.s32.totalorder %v959, 200
      %vm976 = vcmp.lt.s32.totalorder %v960, 200
      %vm977 = vcmp.lt.s32.totalorder %v961, 200
      %vm978 = vcmp.lt.s32.totalorder %v962, 200
      %vm979 = vcmp.lt.s32.totalorder %v963, 200
      %vm980 = vcmp.lt.s32.totalorder %v964, 200
      %vm981 = vcmp.lt.s32.totalorder %v965, 200
      %vm982 = vcmp.lt.s32.totalorder %v966, 200
      %vm983 = vcmp.lt.s32.totalorder %v967, 200
      %vm984 = vcmp.lt.s32.totalorder %v968, 200
      %v985 = vsel %vm969, %v888, -inf
      %v986 = vsel %vm970, %v891, -inf
      %v987 = vsel %vm971, %v894, -inf
      %v988 = vsel %vm972, %v897, -inf
      %v989 = vsel %vm973, %v900, -inf
      %v990 = vsel %vm974, %v903, -inf
      %v991 = vsel %vm975, %v906, -inf
      %v992 = vsel %vm976, %v909, -inf
      %v993 = vsel %vm977, %v912, -inf
      %v994 = vsel %vm978, %v915, -inf
      %v995 = vsel %vm979, %v918, -inf
      %v996 = vsel %vm980, %v921, -inf
      %v997 = vsel %vm981, %v924, -inf
      %v998 = vsel %vm982, %v927, -inf
      %v999 = vsel %vm983, %v930, -inf
      %v1000 = vsel %vm984, %v933, -inf
      %v1001 = vmax.f32 %v985, %v989
      %v1002 = vmax.f32 %v986, %v990
      %v1003 = vmax.f32 %v987, %v991
      %v1004 = vmax.f32 %v988, %v992
      %v1005 = vmax.f32 %v1001, %v993
      %v1006 = vmax.f32 %v1002, %v994
      %v1007 = vmax.f32 %v1003, %v995
      %v1008 = vmax.f32 %v1004, %v996
      %v1009 = vmax.f32 %v1005, %v997
      %v1010 = vmax.f32 %v1006, %v998
      %v1011 = vmax.f32 %v1007, %v999
      %v1012 = vmax.f32 %v1008, %v1000
      %v1013 = vmax.f32 %v1009, %v1010
      %v1014 = vmax.f32 %v1011, %v1012
      %v1015 = vmax.f32 %v1013, %v1014
      %v1016 = vrot.slane %v1015, 4
      %v1017 = vmax.f32 %v1015, %v1016
      %v1018 = vrot.slane %v1017, 2
      %v1019 = vmax.f32 %v1017, %v1018
      %v1020 = vrot.slane %v1019, 1
      %v1021 = vmax.f32 %v1019, %v1020
      %p1022 = scmp.eq.s32.totalorder %s21, 0
      // Predicated region
      $region41: #{mi_net_forward_batched.1} parent=39 // pred_check
        %p1023 = pneg %p1022
      $region42: #{mi_net_forward_batched.1} parent=39 // pred_check_branch
        %1025 = sbr.rel (%p1023) target = $region44
      $region43: #{mi_net_forward_batched.1} parent=39 // pred_region
        %vm1026 = vcmask 0
        %1027 = vst.msk [vmem:[#allocation2] sm:$0x1] %vm1026, -inf
      $region44: #{mi_net_forward_batched.1} parent=39 // pred_fallthru
        _
      %v1028 = vld [vmem:[#allocation2] sm:$0x1]
      %v1029 = vmax.f32 %v1028, %v1021
      %vm1030 = vcmask 0
      %1031 = vst.msk [vmem:[#allocation2] sm:$0x1] %vm1030, %v1029
      %p1032 = scmp.eq.s32.totalorder %s21, 1
      // Predicated region
      $region45: #{mi_net_forward_batched.1} parent=39 // pred_check
        %p1033 = pneg %p1032
      $region46: #{mi_net_forward_batched.1} parent=39 // pred_check_branch
        %1035 = sbr.rel (%p1033) target = $region48
      $region47: #{mi_net_forward_batched.1} parent=39 // pred_region
        %v1036 = vld [vmem:[#allocation2] sm:$0x1]
        %v1037 = vxor.u32 %v1036, 2147483648
        %v1038 = vmul.f32 %v1037, 1.442695
        %v1039 = vpow.pop %v1038
        %v1040 = vadd.f32 %v1039, 1.0
        %v1041 = vrcp.pop %v1040
        %v1042 = vmul.f32 1.0, %v1041
        %v1044 = vlaneseq
        %v1045 = vshrl.u32 %v1044, 7
        %v1046 = vsub.s32 0, %v1045
        %v1047 = vrot.slane %v1042, %v1046
        %1048 = vset.pattern.permute.xlu0 0
        %1049 = vperm.xlu0 %1048, %v1047
        %v1050 = vpop.permute.xlu0 %1049
        %1052 = vst [vmem:[%s250] sm:$0xff] %v1050
      $region48: #{mi_net_forward_batched.1} parent=39 // pred_fallthru
        _
      %p1053 = scmp.lt.s32.totalorder %s20, 2
      %s1054 = scalar_select %p1053, %s20, 2
      %s1055 = smul.addr %s1054, 8
      %s1056 = scalar_lea.vmem %s5, %s1055
      // Predicated region
      $region49: #{mi_net_forward_batched.1} parent=39 // pred_check
        %p1057 = pneg %p158
      $region50: #{mi_net_forward_batched.1} parent=39 // pred_check_branch
        %1059 = sbr.rel (%p1057) target = $region52
      $region51: #{mi_net_forward_batched.1} parent=39 // pred_region
        _
      $region52: #{mi_net_forward_batched.1} parent=39 // pred_fallthru
        _
    $region40: #{mi_net_forward_batched.1} parent=5 // pred_fallthru
      _
    %p1060 = scmp.le.s32.totalorder 2, %s11
    // Predicated region
    $region53: #{mi_net_forward_batched.1} parent=5 // pred_check
      %p1061 = pneg %p1060
    $region54: #{mi_net_forward_batched.1} parent=5 // pred_check_branch
      %1063 = sbr.rel (%p1061) target = $region56
    $region55: #{mi_net_forward_batched.1} parent=5 // pred_region
      %s1064 = ssub.s32 %s11, 2
      // Predicated region
      $region57: #{mi_net_forward_batched.1} parent=55 // pred_check
        %p1065 = pneg %p164
      $region58: #{mi_net_forward_batched.1} parent=55 // pred_check_branch
        %1067 = sbr.rel (%p1065) target = $region60
      $region59: #{mi_net_forward_batched.1} parent=55 // pred_region
        %p1068 = scmp.lt.s32.totalorder %s22, 2
        %s1069 = scalar_select %p1068, %s22, 2
        %s1070 = smul.addr %s1069, 8
        %s1071 = scalar_lea.vmem %s5, %s1070
      $region60: #{mi_net_forward_batched.1} parent=55 // pred_fallthru
        _
    $region56: #{mi_net_forward_batched.1} parent=5 // pred_fallthru
      _
  $region6: #{mi_net_forward_batched.1} parent=0 // loop_footer
    %s15 = sadd.s32 1, %s11
  $region7: #{mi_net_forward_batched.1} parent=0 // loop_footer_branch
    %10 = sbr.rel target = $region3
  $region8: #{mi_net_forward_batched.1} parent=0 // loop_exit
    _

</llo_original>
